<compile_context>
chip_gen: v7x
topology: tpu7x:2x2x1
jax: 0.10.0
libtpu: 0.0.40
codegen_flags: <defaults>
</compile_context>

<pallas_src>
import functools
import math

import jax
import jax.numpy as jnp
import numpy as np
from jax import lax
from jax.experimental import pallas as pl
from jax.experimental.pallas import tpu as pltpu


# ---------------------------------------------------------------------------
# Stage A: kernel generation + BatchNorm + lane-packed / masked tap table.
# Single grid step.
#   xcm_ref   : (c, n*h*w)    x, channels on sublanes, batch*pixels on lanes
#   wcat_ref  : (c+s2, c)     [Wk; Wq]
#   bcat_ref  : (c+s2, 1)     [bk; bq]
#   gamma_ref : (1, c)        BN affine
#   beta_ref  : (1, c)
#   expand_ref: (c, c*w)      channel -> lane-segment expansion matrix
#   g27_ref   : (27, s2)      tap gather matrix (row r -> tap r % s2)
#   lmask_ref : (27, c*w)     per-tap channel-boundary lane masks
#   wall_ref  : (n, 27, c*w)  output: BN'd, lane-expanded, masked tap weights
# ---------------------------------------------------------------------------
def _cac_gen_kernel(xcm_ref, wcat_ref, bcat_ref, gamma_ref, beta_ref,
                    expand_ref, g27_ref, lmask_ref, wall_ref, *, n, hw, eps):
    c = xcm_ref.shape[0]
    s2 = wcat_ref.shape[0] - c

    # Both 1x1 convs for all batches in ONE wide MXU push (amortizes fill/drain).
    f = jnp.dot(wcat_ref[...], xcm_ref[...],
                preferred_element_type=jnp.float32) + bcat_ref[...]   # (c+s2, n*hw)

    # Per-batch bmm:  kt[b, t, ci] = sum_p fq[b, t, p] * fk[b, ci, p]
    # TODO(synk): for very large RoI counts n, block this loop over a grid axis
    # with a two-pass BatchNorm instead of Python-unrolling it.
    kts = []
    for b in range(n):
        fk = f[:c, b * hw:(b + 1) * hw]                # (c,  hw) lane-aligned
        fq = f[c:, b * hw:(b + 1) * hw]                # (s2, hw)
        kt = lax.dot_general(fq, fk, (((1,), (1,)), ((), ())),
                             preferred_element_type=jnp.float32)      # (s2, c)
        kts.append(kt)

    # BatchNorm2d, training mode: biased batch statistics over (n, s, s).
    cnt = float(n * s2)
    ssum = kts[0]
    for kt in kts[1:]:
        ssum = ssum + kt
    mean = jnp.sum(ssum, axis=0, keepdims=True) / cnt                 # (1, c)
    svar = jnp.zeros((1, c), jnp.float32)
    for kt in kts:
        svar = svar + jnp.sum(jnp.square(kt - mean), axis=0, keepdims=True)
    var = svar / cnt
    scale = lax.rsqrt(var + eps) * gamma_ref[...]                     # (1, c)
    shift = beta_ref[...] - mean * scale                              # (1, c)

    g27 = g27_ref[...]
    expand = expand_ref[...]
    lmask = lmask_ref[...]
    for b in range(n):
        kt_bn = kts[b] * scale + shift                                # (s2, c)
        w27 = jnp.dot(g27, kt_bn, preferred_element_type=jnp.float32)  # (27, c)
        wall_ref[b] = jnp.dot(w27, expand,
                              preferred_element_type=jnp.float32) * lmask


# ---------------------------------------------------------------------------
# Stage B: depthwise conv at dilations {1,2,3} + sigmoid + mean.
# One grid step processes B batch planes.
#   xpk_ref  : (B, h+6, c*w)   lane-packed planes, h zero-padded
#   wall_ref : (B, 27,  c*w)   pre-masked lane-expanded tap weights
#   o_ref    : (B, h,   c*w)   lane-packed output
# ---------------------------------------------------------------------------
def _cac_conv_kernel(xpk_ref, wall_ref, o_ref):
    B, hp, cw = xpk_ref.shape
    h = o_ref.shape[1]
    pad = (hp - h) // 2                                # = 3 (max dilation)

    for b in range(B):                                 # B is small & static
        xb = xpk_ref[b]                                # (h+2*pad, cw)
        wb = wall_ref[b]                               # (27, cw)

        # Lane-rolled copies of the padded plane, one per distinct column
        # shift (6 rolls total; dc=0 is the plane itself).  Channel-boundary
        # zeroing is already folded into wb.
        xroll = {0: xb}
        for dc in (-3, -2, -1, 1, 2, 3):
            xroll[dc] = pltpu.roll(xb, shift=(-dc) % cw, axis=1)

        acc = jnp.zeros((h, cw), jnp.float32)
        for di, d in enumerate((1, 2, 3)):
            conv = jnp.zeros((h, cw), jnp.float32)
            for ki in range(3):
                r0 = pad + (ki - 1) * d
                for kj in range(3):
                    dc = (kj - 1) * d
                    t = di * 9 + ki * 3 + kj
                    conv = conv + xroll[dc][r0:r0 + h, :] * wb[t:t + 1, :]
            acc = acc + jax.nn.sigmoid(conv)
        o_ref[b] = acc * (1.0 / 3.0)


# ---------------------------------------------------------------------------
# Wrapper: layout packing + the two pallas_calls
# ---------------------------------------------------------------------------
def cac_forward(x, params, s=3, eps=1e-5, block_n=8):
    assert s == 3, "CaC forward assumes s == 3 (3x3 taps, dilations 1..3)"
    n, c, h, w = x.shape
    s2 = s * s
    hw = h * w
    cw = c * w
    pad = 3                                            # max dilation

    # batch block size for the conv stage; keep >=2 grid steps when possible
    # so both v7x TensorCores get work.
    B = math.gcd(n, block_n)
    if B > 1 and n // B < 2:
        B = math.gcd(n, max(1, B // 2))
    n_steps = n // B

    x = x.astype(jnp.float32)
    # layout A: channels on sublanes, all batches' pixels on lanes
    x_cm = x.reshape(n, c, hw).transpose(1, 0, 2).reshape(c, n * hw)
    # layout B: lane-packed planes (lane = channel*w + column), h zero-padded
    x_pk = jnp.pad(x, ((0, 0), (0, 0), (pad, pad), (0, 0)))
    x_pk = x_pk.transpose(0, 2, 1, 3).reshape(n, h + 2 * pad, cw)

    # fused 1x1-conv weight / bias
    wcat = jnp.concatenate([params["wk"], params["wq"]], axis=0).astype(jnp.float32)
    bcat = jnp.concatenate([params["bk"], params["bq"]], axis=0).astype(jnp.float32)
    gamma = params["gamma"].reshape(1, c).astype(jnp.float32)
    beta = params["beta"].reshape(1, c).astype(jnp.float32)

    # channel -> lane-segment expansion matrix (c, c*w)
    expand = (jnp.arange(cw)[None, :] // w
              == jnp.arange(c)[:, None]).astype(jnp.float32)
    # tap gather matrix (27, s2): row r selects tap r % s2
    g27 = (jnp.arange(3 * s2)[:, None] % s2
           == jnp.arange(s2)[None, :]).astype(jnp.float32)
    # per-tap lane validity masks (27, c*w): zero where the lane roll would
    # cross a channel boundary; folded into the tap weights in stage A.
    j = np.arange(cw) % w
    mrows = []
    for d in (1, 2, 3):
        for ki in range(3):
            for kj in range(3):
                dc = (kj - 1) * d
                if dc >= 0:
                    mrows.append((j < (w - dc)).astype(np.float32))
                else:
                    mrows.append((j >= (-dc)).astype(np.float32))
    lmask27 = jnp.asarray(np.stack(mrows, axis=0))                    # (27, cw)

    # ---- Stage A: kernel generation + BN + masked tap table ----------------
    gen_kernel = functools.partial(_cac_gen_kernel, n=n, hw=hw, eps=eps)
    wall = pl.pallas_call(
        gen_kernel,
        out_shape=jax.ShapeDtypeStruct((n, 3 * s2, cw), jnp.float32),
        grid=(1,),
        in_specs=[
            pl.BlockSpec((c, n * hw), lambda i: (0, 0)),
            pl.BlockSpec((c + s2, c), lambda i: (0, 0)),
            pl.BlockSpec((c + s2, 1), lambda i: (0, 0)),
            pl.BlockSpec((1, c), lambda i: (0, 0)),
            pl.BlockSpec((1, c), lambda i: (0, 0)),
            pl.BlockSpec((c, cw), lambda i: (0, 0)),
            pl.BlockSpec((3 * s2, s2), lambda i: (0, 0)),
            pl.BlockSpec((3 * s2, cw), lambda i: (0, 0)),
        ],
        out_specs=pl.BlockSpec((n, 3 * s2, cw), lambda i: (0, 0, 0)),
        compiler_params=pltpu.CompilerParams(
            dimension_semantics=("arbitrary",)),
    )(x_cm, wcat, bcat, gamma, beta, expand, g27, lmask27)

    # ---- Stage B: 3-dilation depthwise conv + sigmoid + mean ---------------
    out_packed = pl.pallas_call(
        _cac_conv_kernel,
        out_shape=jax.ShapeDtypeStruct((n, h, cw), jnp.float32),
        grid=(n_steps,),
        in_specs=[
            pl.BlockSpec((B, h + 2 * pad, cw), lambda i: (i, 0, 0)),
            pl.BlockSpec((B, 3 * s2, cw), lambda i: (i, 0, 0)),
        ],
        out_specs=pl.BlockSpec((B, h, cw), lambda i: (i, 0, 0)),
        compiler_params=pltpu.CompilerParams(
            dimension_semantics=("parallel",)),
    )(x_pk, wall)

    # unpack (n, h, c*w) -> (n, c, h, w)
    return out_packed.reshape(n, h, c, w).transpose(0, 2, 1, 3)


# ---------------------------------------------------------------------------
# Pure-JAX reference (same math, HIGHEST-precision matmuls)
# ---------------------------------------------------------------------------
def cac_reference(x, params, s=3, eps=1e-5):
    n, c, h, w = x.shape
    xf = x.reshape(n, c, h * w)
    hp = jax.lax.Precision.HIGHEST
    fk = jnp.einsum('oi,nip->nop', params["wk"], xf, precision=hp) + params["bk"][None]
    fq = jnp.einsum('oi,nip->nop', params["wq"], xf, precision=hp) + params["bq"][None]
    krnl = jnp.einsum('ncp,nsp->ncs', fk, fq, precision=hp).reshape(n, c, s, s)
    mean = jnp.mean(krnl, axis=(0, 2, 3), keepdims=True)
    var = jnp.mean((krnl - mean) ** 2, axis=(0, 2, 3), keepdims=True)
    krnl = (krnl - mean) / jnp.sqrt(var + eps)
    krnl = krnl * params["gamma"].reshape(1, c, 1, 1) \
                + params["beta"].reshape(1, c, 1, 1)
    xp = jnp.pad(x, ((0, 0), (0, 0), (3, 3), (3, 3)))
    acc = jnp.zeros_like(x)
    for d in (1, 2, 3):
        conv = jnp.zeros_like(x)
        for ki in range(3):
            for kj in range(3):
                r0 = 3 + (ki - 1) * d
                c0 = 3 + (kj - 1) * d
                wgt = krnl[:, :, ki, kj][:, :, None, None]
                conv = conv + wgt * xp[:, :, r0:r0 + h, c0:c0 + w]
        acc = acc + jax.nn.sigmoid(conv)
    return acc / 3.0


if __name__ == "__main__":
    n, c, h, w, s = 2, 8, 16, 16, 3

    key = jax.random.PRNGKey(0)
    k1, k2, k3, k4, k5 = jax.random.split(key, 5)
    params = {
        # tk: Conv2d(c, c, 1)   -> weight (c, c, 1, 1) viewed as (c, c), bias (c,)
        "wk": jax.random.normal(k1, (c, c), jnp.float32) * 0.2,
        "bk": jax.random.normal(k2, (c, 1), jnp.float32) * 0.1,
        # tq: Conv2d(c, s*s, 1) -> weight (s*s, c, 1, 1) viewed as (s*s, c), bias (s*s,)
        "wq": jax.random.normal(k3, (s * s, c), jnp.float32) * 0.2,
        "bq": jax.random.normal(k4, (s * s, 1), jnp.float32) * 0.1,
        # bn: BatchNorm2d(c) affine params (default init); training-mode stats
        "gamma": jnp.ones((c,), jnp.float32),
        "beta": jnp.zeros((c,), jnp.float32),
    }
    x = jax.random.normal(k5, (n, c, h, w), jnp.float32)

    out = jax.block_until_ready(cac_forward(x, params, s=s))
    ref = jax.block_until_ready(cac_reference(x, params, s=s))
    np.testing.assert_allclose(np.asarray(out), np.asarray(ref), atol=5e-3, rtol=5e-3)

    print("KERNEL_OK")
</pallas_src>

<mosaic_0001>
module attributes {stable_mosaic.version = 11 : i64} {
  func.func @_cac_gen_kernel(%arg0: i32, %arg1: memref<8x512xf32, #tpu.memory_space<vmem>>, %arg2: memref<17x8xf32, #tpu.memory_space<vmem>>, %arg3: memref<17x1xf32, #tpu.memory_space<vmem>>, %arg4: memref<1x8xf32, #tpu.memory_space<vmem>>, %arg5: memref<1x8xf32, #tpu.memory_space<vmem>>, %arg6: memref<8x128xf32, #tpu.memory_space<vmem>>, %arg7: memref<27x9xf32, #tpu.memory_space<vmem>>, %arg8: memref<27x128xf32, #tpu.memory_space<vmem>>, %arg9: memref<2x27x128xf32, #tpu.memory_space<vmem>>) attributes {dimension_semantics = [#tpu.dimension_semantics<arbitrary>], iteration_bounds = array<i64: 1>, scalar_prefetch = 0 : i64, scratch_operands = 0 : i64, tpu.core_type = #tpu.core_type<tc>, window_params = [{pipeline_mode = #tpu.pipeline_mode<synchronous>, transform_indices = @transform_0, window_bounds = array<i64: 8, 512>}, {pipeline_mode = #tpu.pipeline_mode<synchronous>, transform_indices = @transform_1, window_bounds = array<i64: 17, 8>}, {pipeline_mode = #tpu.pipeline_mode<synchronous>, transform_indices = @transform_2, window_bounds = array<i64: 17, 1>}, {pipeline_mode = #tpu.pipeline_mode<synchronous>, transform_indices = @transform_3, window_bounds = array<i64: 1, 8>}, {pipeline_mode = #tpu.pipeline_mode<synchronous>, transform_indices = @transform_4, window_bounds = array<i64: 1, 8>}, {pipeline_mode = #tpu.pipeline_mode<synchronous>, transform_indices = @transform_5, window_bounds = array<i64: 8, 128>}, {pipeline_mode = #tpu.pipeline_mode<synchronous>, transform_indices = @transform_6, window_bounds = array<i64: 27, 9>}, {pipeline_mode = #tpu.pipeline_mode<synchronous>, transform_indices = @transform_7, window_bounds = array<i64: 27, 128>}, {pipeline_mode = #tpu.pipeline_mode<synchronous>, transform_indices = @transform_8, window_bounds = array<i64: 2, 27, 128>}]} {
    %c0 = arith.constant 0 : index
    %c0_0 = arith.constant 0 : index
    %0 = vector.load %arg2[%c0, %c0_0] : memref<17x8xf32, #tpu.memory_space<vmem>>, vector<17x8xf32>
    %c0_1 = arith.constant 0 : index
    %c0_2 = arith.constant 0 : index
    %1 = vector.load %arg1[%c0_1, %c0_2] : memref<8x512xf32, #tpu.memory_space<vmem>>, vector<8x512xf32>
    %cst = arith.constant dense<0.000000e+00> : vector<17x512xf32>
    %2 = tpu.matmul %0, %1, %cst {dimension_numbers = #tpu.dot_dimension_numbers<[1], [0], [0], [1], [0, 0, 1, 1], [], []>} : vector<17x8xf32>, vector<8x512xf32>, vector<17x512xf32> -> vector<17x512xf32>
    %c0_3 = arith.constant 0 : index
    %c0_4 = arith.constant 0 : index
    %3 = vector.load %arg3[%c0_3, %c0_4] : memref<17x1xf32, #tpu.memory_space<vmem>>, vector<17x1xf32>
    %4 = vector.broadcast %3 : vector<17x1xf32> to vector<17x512xf32>
    %5 = arith.addf %2, %4 : vector<17x512xf32>
    %6 = vector.extract_strided_slice %5 {offsets = [0, 0], sizes = [8, 256], strides = [1, 1]} : vector<17x512xf32> to vector<8x256xf32>
    %7 = vector.extract_strided_slice %5 {offsets = [8, 0], sizes = [9, 256], strides = [1, 1]} : vector<17x512xf32> to vector<9x256xf32>
    %cst_5 = arith.constant dense<0.000000e+00> : vector<9x8xf32>
    %8 = tpu.matmul %7, %6, %cst_5 {dimension_numbers = #tpu.dot_dimension_numbers<[1], [1], [0], [0], [0, 0, 1, 0], [], []>} : vector<9x256xf32>, vector<8x256xf32>, vector<9x8xf32> -> vector<9x8xf32>
    %9 = vector.extract_strided_slice %5 {offsets = [0, 256], sizes = [8, 256], strides = [1, 1]} : vector<17x512xf32> to vector<8x256xf32>
    %10 = vector.extract_strided_slice %5 {offsets = [8, 256], sizes = [9, 256], strides = [1, 1]} : vector<17x512xf32> to vector<9x256xf32>
    %cst_6 = arith.constant dense<0.000000e+00> : vector<9x8xf32>
    %11 = tpu.matmul %10, %9, %cst_6 {dimension_numbers = #tpu.dot_dimension_numbers<[1], [1], [0], [0], [0, 0, 1, 0], [], []>} : vector<9x256xf32>, vector<8x256xf32>, vector<9x8xf32> -> vector<9x8xf32>
    %12 = arith.addf %8, %11 : vector<9x8xf32>
    %cst_7 = arith.constant dense<0.000000e+00> : vector<8xf32>
    %13 = vector.multi_reduction <add>, %12, %cst_7 [0] : vector<9x8xf32> to vector<8xf32>
    %14 = vector.shape_cast %13 : vector<8xf32> to vector<1x8xf32>
    %cst_8 = arith.constant 1.800000e+01 : f32
    %15 = vector.broadcast %cst_8 : f32 to vector<1x8xf32>
    %16 = arith.divf %14, %15 : vector<1x8xf32>
    %cst_9 = arith.constant 0.000000e+00 : f32
    %17 = vector.broadcast %cst_9 : f32 to vector<1x8xf32>
    %18 = vector.broadcast %16 : vector<1x8xf32> to vector<9x8xf32>
    %19 = arith.subf %8, %18 : vector<9x8xf32>
    %20 = arith.mulf %19, %19 : vector<9x8xf32>
    %cst_10 = arith.constant dense<0.000000e+00> : vector<8xf32>
    %21 = vector.multi_reduction <add>, %20, %cst_10 [0] : vector<9x8xf32> to vector<8xf32>
    %22 = vector.shape_cast %21 : vector<8xf32> to vector<1x8xf32>
    %23 = arith.addf %17, %22 : vector<1x8xf32>
    %24 = vector.broadcast %16 : vector<1x8xf32> to vector<9x8xf32>
    %25 = arith.subf %11, %24 : vector<9x8xf32>
    %26 = arith.mulf %25, %25 : vector<9x8xf32>
    %cst_11 = arith.constant dense<0.000000e+00> : vector<8xf32>
    %27 = vector.multi_reduction <add>, %26, %cst_11 [0] : vector<9x8xf32> to vector<8xf32>
    %28 = vector.shape_cast %27 : vector<8xf32> to vector<1x8xf32>
    %29 = arith.addf %23, %28 : vector<1x8xf32>
    %cst_12 = arith.constant 1.800000e+01 : f32
    %30 = vector.broadcast %cst_12 : f32 to vector<1x8xf32>
    %31 = arith.divf %29, %30 : vector<1x8xf32>
    %cst_13 = arith.constant 9.99999974E-6 : f32
    %32 = vector.broadcast %cst_13 : f32 to vector<1x8xf32>
    %33 = arith.addf %31, %32 : vector<1x8xf32>
    %34 = math.rsqrt %33 : vector<1x8xf32>
    %c0_14 = arith.constant 0 : index
    %c0_15 = arith.constant 0 : index
    %35 = vector.load %arg4[%c0_14, %c0_15] : memref<1x8xf32, #tpu.memory_space<vmem>>, vector<1x8xf32>
    %36 = arith.mulf %34, %35 : vector<1x8xf32>
    %c0_16 = arith.constant 0 : index
    %c0_17 = arith.constant 0 : index
    %37 = vector.load %arg5[%c0_16, %c0_17] : memref<1x8xf32, #tpu.memory_space<vmem>>, vector<1x8xf32>
    %38 = arith.mulf %16, %36 : vector<1x8xf32>
    %39 = arith.subf %37, %38 : vector<1x8xf32>
    %c0_18 = arith.constant 0 : index
    %c0_19 = arith.constant 0 : index
    %40 = vector.load %arg7[%c0_18, %c0_19] : memref<27x9xf32, #tpu.memory_space<vmem>>, vector<27x9xf32>
    %c0_20 = arith.constant 0 : index
    %c0_21 = arith.constant 0 : index
    %41 = vector.load %arg6[%c0_20, %c0_21] : memref<8x128xf32, #tpu.memory_space<vmem>>, vector<8x128xf32>
    %c0_22 = arith.constant 0 : index
    %c0_23 = arith.constant 0 : index
    %42 = vector.load %arg8[%c0_22, %c0_23] : memref<27x128xf32, #tpu.memory_space<vmem>>, vector<27x128xf32>
    %43 = vector.broadcast %36 : vector<1x8xf32> to vector<9x8xf32>
    %44 = arith.mulf %8, %43 : vector<9x8xf32>
    %45 = vector.broadcast %39 : vector<1x8xf32> to vector<9x8xf32>
    %46 = arith.addf %44, %45 : vector<9x8xf32>
    %cst_24 = arith.constant dense<0.000000e+00> : vector<27x8xf32>
    %47 = tpu.matmul %40, %46, %cst_24 {dimension_numbers = #tpu.dot_dimension_numbers<[1], [0], [0], [1], [0, 0, 1, 1], [], []>} : vector<27x9xf32>, vector<9x8xf32>, vector<27x8xf32> -> vector<27x8xf32>
    %cst_25 = arith.constant dense<0.000000e+00> : vector<27x128xf32>
    %48 = tpu.matmul %47, %41, %cst_25 {dimension_numbers = #tpu.dot_dimension_numbers<[1], [0], [0], [1], [0, 0, 1, 1], [], []>} : vector<27x8xf32>, vector<8x128xf32>, vector<27x128xf32> -> vector<27x128xf32>
    %49 = arith.mulf %48, %42 : vector<27x128xf32>
    %c0_26 = arith.constant 0 : index
    %c0_27 = arith.constant 0 : index
    %c0_28 = arith.constant 0 : index
    %50 = vector.load %arg9[%c0_26, %c0_27, %c0_28] : memref<2x27x128xf32, #tpu.memory_space<vmem>>, vector<1x27x128xf32>
    %51 = vector.shape_cast %50 : vector<1x27x128xf32> to vector<27x128xf32>
    %52 = vector.shape_cast %49 : vector<27x128xf32> to vector<1x27x128xf32>
    tpu.vector_store %arg9[%c0_26, %c0_27, %c0_28], %52 {strides = array<i32>} : memref<2x27x128xf32, #tpu.memory_space<vmem>>, vector<1x27x128xf32>,
    %53 = vector.broadcast %36 : vector<1x8xf32> to vector<9x8xf32>
    %54 = arith.mulf %11, %53 : vector<9x8xf32>
    %55 = vector.broadcast %39 : vector<1x8xf32> to vector<9x8xf32>
    %56 = arith.addf %54, %55 : vector<9x8xf32>
    %cst_29 = arith.constant dense<0.000000e+00> : vector<27x8xf32>
    %57 = tpu.matmul %40, %56, %cst_29 {dimension_numbers = #tpu.dot_dimension_numbers<[1], [0], [0], [1], [0, 0, 1, 1], [], []>} : vector<27x9xf32>, vector<9x8xf32>, vector<27x8xf32> -> vector<27x8xf32>
    %cst_30 = arith.constant dense<0.000000e+00> : vector<27x128xf32>
    %58 = tpu.matmul %57, %41, %cst_30 {dimension_numbers = #tpu.dot_dimension_numbers<[1], [0], [0], [1], [0, 0, 1, 1], [], []>} : vector<27x8xf32>, vector<8x128xf32>, vector<27x128xf32> -> vector<27x128xf32>
    %59 = arith.mulf %58, %42 : vector<27x128xf32>
    %c1 = arith.constant 1 : index
    %c0_31 = arith.constant 0 : index
    %c0_32 = arith.constant 0 : index
    %60 = vector.load %arg9[%c1, %c0_31, %c0_32] : memref<2x27x128xf32, #tpu.memory_space<vmem>>, vector<1x27x128xf32>
    %61 = vector.shape_cast %60 : vector<1x27x128xf32> to vector<27x128xf32>
    %62 = vector.shape_cast %59 : vector<27x128xf32> to vector<1x27x128xf32>
    tpu.vector_store %arg9[%c1, %c0_31, %c0_32], %62 {strides = array<i32>} : memref<2x27x128xf32, #tpu.memory_space<vmem>>, vector<1x27x128xf32>,
    return
  }
  func.func @transform_0(%arg0: i32) -> (i32, i32) {
    %c0_i32 = arith.constant 0 : i32
    %c0_i32_0 = arith.constant 0 : i32
    %c0_i32_1 = arith.constant 0 : i32
    return %c0_i32, %c0_i32_0 : i32, i32
  }
  func.func @transform_1(%arg0: i32) -> (i32, i32) {
    %c0_i32 = arith.constant 0 : i32
    %c0_i32_0 = arith.constant 0 : i32
    %c0_i32_1 = arith.constant 0 : i32
    return %c0_i32, %c0_i32_0 : i32, i32
  }
  func.func @transform_2(%arg0: i32) -> (i32, i32) {
    %c0_i32 = arith.constant 0 : i32
    %c0_i32_0 = arith.constant 0 : i32
    %c0_i32_1 = arith.constant 0 : i32
    return %c0_i32, %c0_i32_0 : i32, i32
  }
  func.func @transform_3(%arg0: i32) -> (i32, i32) {
    %c0_i32 = arith.constant 0 : i32
    %c0_i32_0 = arith.constant 0 : i32
    %c0_i32_1 = arith.constant 0 : i32
    return %c0_i32, %c0_i32_0 : i32, i32
  }
  func.func @transform_4(%arg0: i32) -> (i32, i32) {
    %c0_i32 = arith.constant 0 : i32
    %c0_i32_0 = arith.constant 0 : i32
    %c0_i32_1 = arith.constant 0 : i32
    return %c0_i32, %c0_i32_0 : i32, i32
  }
  func.func @transform_5(%arg0: i32) -> (i32, i32) {
    %c0_i32 = arith.constant 0 : i32
    %c0_i32_0 = arith.constant 0 : i32
    %c0_i32_1 = arith.constant 0 : i32
    return %c0_i32, %c0_i32_0 : i32, i32
  }
  func.func @transform_6(%arg0: i32) -> (i32, i32) {
    %c0_i32 = arith.constant 0 : i32
    %c0_i32_0 = arith.constant 0 : i32
    %c0_i32_1 = arith.constant 0 : i32
    return %c0_i32, %c0_i32_0 : i32, i32
  }
  func.func @transform_7(%arg0: i32) -> (i32, i32) {
    %c0_i32 = arith.constant 0 : i32
    %c0_i32_0 = arith.constant 0 : i32
    %c0_i32_1 = arith.constant 0 : i32
    return %c0_i32, %c0_i32_0 : i32, i32
  }
  func.func @transform_8(%arg0: i32) -> (i32, i32, i32) {
    %c0_i32 = arith.constant 0 : i32
    %c0_i32_0 = arith.constant 0 : i32
    %c0_i32_1 = arith.constant 0 : i32
    %c0_i32_2 = arith.constant 0 : i32
    return %c0_i32, %c0_i32_0, %c0_i32_1 : i32, i32, i32
  }
}

</mosaic_0001>

<llo_original>
// kernel: tpu_custom_call.1
$region0: #{tpu_custom_call.1}
  #allocation0 [shape = 'u32[]', space=smem, size = 0x4, offset = 0x4, fixed_abs, tag = 'smem constant byte address 0x4 - core index']
  #allocation1 [shape = 'u32[144,128]{1,0:T(1,128)}', space=vmem, size = 0x12000, scoped, tag = 'internal scratch']
  %s0 = inlined_call_operand.vmem [shape: f32[8,512], index: 0, kind: input, shape index: {}]
  %s1 = inlined_call_operand.vmem [shape: f32[17,8], index: 1, kind: input, shape index: {}]
  %s2 = inlined_call_operand.vmem [shape: f32[17,1], index: 2, kind: input, shape index: {}]
  %s3 = inlined_call_operand.vmem [shape: f32[1,8], index: 3, kind: input, shape index: {}]
  %s4 = inlined_call_operand.vmem [shape: f32[1,8], index: 4, kind: input, shape index: {}]
  %s5 = inlined_call_operand.vmem [shape: f32[8,128], index: 5, kind: input, shape index: {}]
  %s6 = inlined_call_operand.vmem [shape: f32[27,9], index: 6, kind: input, shape index: {}]
  %s7 = inlined_call_operand.vmem [shape: f32[27,128], index: 7, kind: input, shape index: {}]
  %s8 = inlined_call_operand.vmem [shape: f32[2,27,128], index: 8, kind: output, shape index: {}]
  %s9 = sld [smem:[#allocation0]]
  $region42: #{tpu_custom_call.1} parent=0
    _
  %s11 = ssub.s32 1, %s9
  %s12 = scalar_select 0, %s11, %s9
  // Predicated region
  $region2: #{tpu_custom_call.1} parent=0 // pred_check
    _
  $region3: #{tpu_custom_call.1} parent=0 // pred_check_branch
    %14 = sbr.rel (0) target = $region5
  $region4: #{tpu_custom_call.1} parent=0 // pred_region
    _
  $region5: #{tpu_custom_call.1} parent=0 // pred_fallthru
    _
  // Predicated region
  $region6: #{tpu_custom_call.1} parent=0 // pred_check
    _
  $region7: #{tpu_custom_call.1} parent=0 // pred_check_branch
    %16 = sbr.rel (0) target = $region9
  $region8: #{tpu_custom_call.1} parent=0 // pred_region
    _
  $region9: #{tpu_custom_call.1} parent=0 // pred_fallthru
    _
  // Predicated region
  $region10: #{tpu_custom_call.1} parent=0 // pred_check
    _
  $region11: #{tpu_custom_call.1} parent=0 // pred_check_branch
    %18 = sbr.rel (0) target = $region13
  $region12: #{tpu_custom_call.1} parent=0 // pred_region
    _
  $region13: #{tpu_custom_call.1} parent=0 // pred_fallthru
    _
  // Predicated region
  $region14: #{tpu_custom_call.1} parent=0 // pred_check
    _
  $region15: #{tpu_custom_call.1} parent=0 // pred_check_branch
    %20 = sbr.rel (0) target = $region17
  $region16: #{tpu_custom_call.1} parent=0 // pred_region
    _
  $region17: #{tpu_custom_call.1} parent=0 // pred_fallthru
    _
  // Predicated region
  $region18: #{tpu_custom_call.1} parent=0 // pred_check
    _
  $region19: #{tpu_custom_call.1} parent=0 // pred_check_branch
    %22 = sbr.rel (0) target = $region21
  $region20: #{tpu_custom_call.1} parent=0 // pred_region
    _
  $region21: #{tpu_custom_call.1} parent=0 // pred_fallthru
    _
  // Predicated region
  $region22: #{tpu_custom_call.1} parent=0 // pred_check
    _
  $region23: #{tpu_custom_call.1} parent=0 // pred_check_branch
    %24 = sbr.rel (0) target = $region25
  $region24: #{tpu_custom_call.1} parent=0 // pred_region
    _
  $region25: #{tpu_custom_call.1} parent=0 // pred_fallthru
    _
  // Predicated region
  $region26: #{tpu_custom_call.1} parent=0 // pred_check
    _
  $region27: #{tpu_custom_call.1} parent=0 // pred_check_branch
    %26 = sbr.rel (0) target = $region29
  $region28: #{tpu_custom_call.1} parent=0 // pred_region
    _
  $region29: #{tpu_custom_call.1} parent=0 // pred_fallthru
    _
  // Predicated region
  $region30: #{tpu_custom_call.1} parent=0 // pred_check
    _
  $region31: #{tpu_custom_call.1} parent=0 // pred_check_branch
    %28 = sbr.rel (0) target = $region33
  $region32: #{tpu_custom_call.1} parent=0 // pred_region
    _
  $region33: #{tpu_custom_call.1} parent=0 // pred_fallthru
    _
  %v29 = vld [vmem:[%s1] sm:$0xff]
  %v30 = vld [vmem:[%s1 + $0x8] sm:$0xff]
  %v31 = vld [vmem:[%s1 + $0x10] sm:$0x1]
  %v32 = vld [vmem:[%s0] sm:$0xff]
  %v33 = vld [vmem:[%s0 + $0x8] sm:$0xff]
  %v34 = vld [vmem:[%s0 + $0x10] sm:$0xff]
  %v35 = vld [vmem:[%s0 + $0x18] sm:$0xff]
  %v36 = vld [vmem:[%s2] sm:$0xff]
  %v37 = vld [vmem:[%s2 + $0x8] sm:$0xff]
  %v38 = vld [vmem:[%s2 + $0x10] sm:$0x1]
  %40 = vset.pattern.permute.xlu0 0
  %41 = vperm.xlu0 %40, %v36
  %v42 = vpop.permute.xlu0 %41
  %45 = vset.pattern.permute.xlu0 0
  %46 = vperm.xlu0 %45, %v37
  %v47 = vpop.permute.xlu0 %46
  %50 = vset.pattern.permute.xlu0 0
  %51 = vperm.xlu0 %50, %v38
  %v52 = vpop.permute.xlu0 %51
  %vm54 = vcmask 64512
  %v56 = vsel %vm54, %v29, 0
  %v59 = vsel %vm54, %v30, 0
  %v62 = vsel %vm54, %v31, 0
  %64 = vmatprep.subr.mxu0 %v33
  %65 = vmatpush1.msra.mxu0 %v32
  %66 = vmatprep.subr.mxu0 0.0
  %67 = vmatpush1.msra.mxu0 0.0
  %68 = vmatprep.subr.mxu0 0.0
  %69 = vmatpush1.msra.mxu0 0.0
  %70 = vmatprep.subr.mxu0 0.0
  %71 = vmatpush1.msra.mxu0 0.0
  %72 = vmatprep.subr.mxu0 0.0
  %73 = vmatpush1.msra.mxu0 0.0
  %74 = vmatprep.subr.mxu0 0.0
  %75 = vmatpush1.msra.mxu0 0.0
  %76 = vmatprep.subr.mxu0 0.0
  %77 = vmatpush1.msra.mxu0 0.0
  %78 = vmatprep.subr.mxu0 0.0
  %79 = vmatpush1.msra.mxu0 0.0
  %80 = vmatprep.subr.mxu0 0.0
  %81 = vmatpush1.msra.mxu0 0.0
  %82 = vmatprep.subr.mxu0 0.0
  %83 = vmatpush1.msra.mxu0 0.0
  %84 = vmatprep.subr.mxu0 0.0
  %85 = vmatpush1.msra.mxu0 0.0
  %86 = vmatprep.subr.mxu0 0.0
  %87 = vmatpush1.msra.mxu0 0.0
  %88 = vmatprep.subr.mxu0 0.0
  %89 = vmatpush1.msra.mxu0 0.0
  %90 = vmatprep.subr.mxu0 0.0
  %91 = vmatpush1.msra.mxu0 0.0
  %92 = vmatprep.subr.mxu0 0.0
  %93 = vmatpush1.msra.mxu0 0.0
  %94 = vmatprep.subr.mxu0 0.0
  %95 = vmatpush1.msra.mxu0 0.0
  %96 = vmatprep.subr.mxu0 0.0
  %97 = vmatpush1.msra.mxu0 0.0
  %98 = vmatprep.subr.mxu0 0.0
  %99 = vmatpush1.msra.mxu0 0.0
  %100 = vmatprep.subr.mxu0 0.0
  %101 = vmatpush1.msra.mxu0 0.0
  %102 = vmatprep.subr.mxu0 0.0
  %103 = vmatpush1.msra.mxu0 0.0
  %104 = vmatprep.subr.mxu0 0.0
  %105 = vmatpush1.msra.mxu0 0.0
  %106 = vmatprep.subr.mxu0 0.0
  %107 = vmatpush1.msra.mxu0 0.0
  %108 = vmatprep.subr.mxu0 0.0
  %109 = vmatpush1.msra.mxu0 0.0
  %110 = vmatprep.subr.mxu0 0.0
  %111 = vmatpush1.msra.mxu0 0.0
  %112 = vmatprep.subr.mxu0 0.0
  %113 = vmatpush1.msra.mxu0 0.0
  %114 = vmatprep.subr.mxu0 0.0
  %115 = vmatpush1.msra.mxu0 0.0
  %116 = vmatprep.subr.mxu0 0.0
  %117 = vmatpush1.msra.mxu0 0.0
  %118 = vmatprep.subr.mxu0 0.0
  %119 = vmatpush1.msra.mxu0 0.0
  %120 = vmatprep.subr.mxu0 0.0
  %121 = vmatpush1.msra.mxu0 0.0
  %122 = vmatprep.subr.mxu0 0.0
  %123 = vmatpush1.msra.mxu0 0.0
  %124 = vmatprep.subr.mxu0 0.0
  %125 = vmatpush1.msra.mxu0 0.0
  %126 = vmatprep.subr.mxu0 0.0
  %127 = vmatpush1.msra.mxu0 0.0
  %128 = vmatprep.mubr.f32.mxu0 0.0
  %129 = vmatmul.mubr.f32.gmra.mrb[0].mxu0 %v56
  %v130 = vpop.f32.mrb[0].mxu0
  %v131 = vadd.f32 %v42, %v130
  %v132 = vpop.f32.mrb[0].mxu0
  %v133 = vadd.f32 %v42, %v132
  %134 = vmatprep.mubr.f32.mxu0 0.0
  %135 = vmatmul.mubr.f32.gmra.mrb[0].mxu0 %v59
  %v136 = vpop.f32.mrb[0].mxu0
  %v137 = vadd.f32 %v47, %v136
  %v138 = vpop.f32.mrb[0].mxu0
  %v139 = vadd.f32 %v47, %v138
  %140 = vmatprep.mubr.f32.mxu0 0.0
  %141 = vmatmul.mubr.f32.gmra.mrb[0].mxu0 %v62
  %v142 = vpop.f32.mrb[0].mxu0
  %v143 = vadd.f32 %v52, %v142
  %v144 = vpop.f32.mrb[0].mxu0
  %v145 = vadd.f32 %v52, %v144
  %146 = vdwg.mxu0
  %147 = vmatprep.subr.mxu0 %v35
  %148 = vmatpush1.msra.mxu0 %v34
  %149 = vmatprep.subr.mxu0 0.0
  %150 = vmatpush1.msra.mxu0 0.0
  %151 = vmatprep.subr.mxu0 0.0
  %152 = vmatpush1.msra.mxu0 0.0
  %153 = vmatprep.subr.mxu0 0.0
  %154 = vmatpush1.msra.mxu0 0.0
  %155 = vmatprep.subr.mxu0 0.0
  %156 = vmatpush1.msra.mxu0 0.0
  %157 = vmatprep.subr.mxu0 0.0
  %158 = vmatpush1.msra.mxu0 0.0
  %159 = vmatprep.subr.mxu0 0.0
  %160 = vmatpush1.msra.mxu0 0.0
  %161 = vmatprep.subr.mxu0 0.0
  %162 = vmatpush1.msra.mxu0 0.0
  %163 = vmatprep.subr.mxu0 0.0
  %164 = vmatpush1.msra.mxu0 0.0
  %165 = vmatprep.subr.mxu0 0.0
  %166 = vmatpush1.msra.mxu0 0.0
  %167 = vmatprep.subr.mxu0 0.0
  %168 = vmatpush1.msra.mxu0 0.0
  %169 = vmatprep.subr.mxu0 0.0
  %170 = vmatpush1.msra.mxu0 0.0
  %171 = vmatprep.subr.mxu0 0.0
  %172 = vmatpush1.msra.mxu0 0.0
  %173 = vmatprep.subr.mxu0 0.0
  %174 = vmatpush1.msra.mxu0 0.0
  %175 = vmatprep.subr.mxu0 0.0
  %176 = vmatpush1.msra.mxu0 0.0
  %177 = vmatprep.subr.mxu0 0.0
  %178 = vmatpush1.msra.mxu0 0.0
  %179 = vmatprep.subr.mxu0 0.0
  %180 = vmatpush1.msra.mxu0 0.0
  %181 = vmatprep.subr.mxu0 0.0
  %182 = vmatpush1.msra.mxu0 0.0
  %183 = vmatprep.subr.mxu0 0.0
  %184 = vmatpush1.msra.mxu0 0.0
  %185 = vmatprep.subr.mxu0 0.0
  %186 = vmatpush1.msra.mxu0 0.0
  %187 = vmatprep.subr.mxu0 0.0
  %188 = vmatpush1.msra.mxu0 0.0
  %189 = vmatprep.subr.mxu0 0.0
  %190 = vmatpush1.msra.mxu0 0.0
  %191 = vmatprep.subr.mxu0 0.0
  %192 = vmatpush1.msra.mxu0 0.0
  %193 = vmatprep.subr.mxu0 0.0
  %194 = vmatpush1.msra.mxu0 0.0
  %195 = vmatprep.subr.mxu0 0.0
  %196 = vmatpush1.msra.mxu0 0.0
  %197 = vmatprep.subr.mxu0 0.0
  %198 = vmatpush1.msra.mxu0 0.0
  %199 = vmatprep.subr.mxu0 0.0
  %200 = vmatpush1.msra.mxu0 0.0
  %201 = vmatprep.subr.mxu0 0.0
  %202 = vmatpush1.msra.mxu0 0.0
  %203 = vmatprep.subr.mxu0 0.0
  %204 = vmatpush1.msra.mxu0 0.0
  %205 = vmatprep.subr.mxu0 0.0
  %206 = vmatpush1.msra.mxu0 0.0
  %207 = vmatprep.subr.mxu0 0.0
  %208 = vmatpush1.msra.mxu0 0.0
  %209 = vmatprep.subr.mxu0 0.0
  %210 = vmatpush1.msra.mxu0 0.0
  %211 = vmatprep.mubr.f32.mxu0 0.0
  %212 = vmatmul.mubr.f32.gmra.mrb[0].mxu0 %v56
  %v213 = vpop.f32.mrb[0].mxu0
  %v214 = vadd.f32 %v42, %v213
  %v215 = vpop.f32.mrb[0].mxu0
  %v216 = vadd.f32 %v42, %v215
  %217 = vmatprep.mubr.f32.mxu0 0.0
  %218 = vmatmul.mubr.f32.gmra.mrb[0].mxu0 %v59
  %v219 = vpop.f32.mrb[0].mxu0
  %v220 = vadd.f32 %v47, %v219
  %v221 = vpop.f32.mrb[0].mxu0
  %v222 = vadd.f32 %v47, %v221
  %223 = vmatprep.mubr.f32.mxu0 0.0
  %224 = vmatmul.mubr.f32.gmra.mrb[0].mxu0 %v62
  %v225 = vpop.f32.mrb[0].mxu0
  %v226 = vadd.f32 %v52, %v225
  %v227 = vpop.f32.mrb[0].mxu0
  %v228 = vadd.f32 %v52, %v227
  %229 = vdwg.mxu0
  %230 = vmatprep.subr.mxu0 %v133
  %231 = vmatpush1.xpose.msra.mxu0 %v131
  %232 = vmatprep.subr.mxu0 0.0
  %233 = vmatpush1.xpose.msra.mxu0 0.0
  %234 = vmatprep.subr.mxu0 0.0
  %235 = vmatpush1.xpose.msra.mxu0 0.0
  %236 = vmatprep.subr.mxu0 0.0
  %237 = vmatpush1.xpose.msra.mxu0 0.0
  %238 = vmatprep.subr.mxu0 0.0
  %239 = vmatpush1.xpose.msra.mxu0 0.0
  %240 = vmatprep.subr.mxu0 0.0
  %241 = vmatpush1.xpose.msra.mxu0 0.0
  %242 = vmatprep.subr.mxu0 0.0
  %243 = vmatpush1.xpose.msra.mxu0 0.0
  %244 = vmatprep.subr.mxu0 0.0
  %245 = vmatpush1.xpose.msra.mxu0 0.0
  %246 = vmatprep.subr.mxu0 0.0
  %247 = vmatpush1.xpose.msra.mxu0 0.0
  %248 = vmatprep.subr.mxu0 0.0
  %249 = vmatpush1.xpose.msra.mxu0 0.0
  %250 = vmatprep.subr.mxu0 0.0
  %251 = vmatpush1.xpose.msra.mxu0 0.0
  %252 = vmatprep.subr.mxu0 0.0
  %253 = vmatpush1.xpose.msra.mxu0 0.0
  %254 = vmatprep.subr.mxu0 0.0
  %255 = vmatpush1.xpose.msra.mxu0 0.0
  %256 = vmatprep.subr.mxu0 0.0
  %257 = vmatpush1.xpose.msra.mxu0 0.0
  %258 = vmatprep.subr.mxu0 0.0
  %259 = vmatpush1.xpose.msra.mxu0 0.0
  %260 = vmatprep.subr.mxu0 0.0
  %261 = vmatpush1.xpose.msra.mxu0 0.0
  %262 = vmatprep.subr.mxu0 0.0
  %263 = vmatpush1.xpose.msra.mxu0 0.0
  %264 = vmatprep.subr.mxu0 0.0
  %265 = vmatpush1.xpose.msra.mxu0 0.0
  %266 = vmatprep.subr.mxu0 0.0
  %267 = vmatpush1.xpose.msra.mxu0 0.0
  %268 = vmatprep.subr.mxu0 0.0
  %269 = vmatpush1.xpose.msra.mxu0 0.0
  %270 = vmatprep.subr.mxu0 0.0
  %271 = vmatpush1.xpose.msra.mxu0 0.0
  %272 = vmatprep.subr.mxu0 0.0
  %273 = vmatpush1.xpose.msra.mxu0 0.0
  %274 = vmatprep.subr.mxu0 0.0
  %275 = vmatpush1.xpose.msra.mxu0 0.0
  %276 = vmatprep.subr.mxu0 0.0
  %277 = vmatpush1.xpose.msra.mxu0 0.0
  %278 = vmatprep.subr.mxu0 0.0
  %279 = vmatpush1.xpose.msra.mxu0 0.0
  %280 = vmatprep.subr.mxu0 0.0
  %281 = vmatpush1.xpose.msra.mxu0 0.0
  %282 = vmatprep.subr.mxu0 0.0
  %283 = vmatpush1.xpose.msra.mxu0 0.0
  %284 = vmatprep.subr.mxu0 0.0
  %285 = vmatpush1.xpose.msra.mxu0 0.0
  %286 = vmatprep.subr.mxu0 0.0
  %287 = vmatpush1.xpose.msra.mxu0 0.0
  %288 = vmatprep.subr.mxu0 0.0
  %289 = vmatpush1.xpose.msra.mxu0 0.0
  %290 = vmatprep.subr.mxu0 0.0
  %291 = vmatpush1.xpose.msra.mxu0 0.0
  %292 = vmatprep.subr.mxu0 0.0
  %293 = vmatpush1.xpose.msra.mxu0 0.0
  %294 = vmatprep.mubr.f32.mxu0 %v139
  %295 = vmatmul.mubr.f32.gmra.mrb[0].mxu0 %v137
  %v296 = vpop.f32.mrb[0].mxu0
  %v297 = vadd.f32 0.0, %v296
  %v298 = vpop.f32.mrb[0].mxu0
  %299 = vmatprep.mubr.f32.mxu0 %v145
  %300 = vmatmul.mubr.f32.gmra.mrb[0].mxu0 %v143
  %v301 = vpop.f32.mrb[0].mxu0
  %v302 = vadd.f32 0.0, %v301
  %v303 = vpop.f32.mrb[0].mxu0
  %304 = vdwg.mxu0
  %305 = vmatprep.subr.mxu0 %v216
  %306 = vmatpush1.xpose.msra.mxu0 %v214
  %307 = vmatprep.subr.mxu0 0.0
  %308 = vmatpush1.xpose.msra.mxu0 0.0
  %309 = vmatprep.subr.mxu0 0.0
  %310 = vmatpush1.xpose.msra.mxu0 0.0
  %311 = vmatprep.subr.mxu0 0.0
  %312 = vmatpush1.xpose.msra.mxu0 0.0
  %313 = vmatprep.subr.mxu0 0.0
  %314 = vmatpush1.xpose.msra.mxu0 0.0
  %315 = vmatprep.subr.mxu0 0.0
  %316 = vmatpush1.xpose.msra.mxu0 0.0
  %317 = vmatprep.subr.mxu0 0.0
  %318 = vmatpush1.xpose.msra.mxu0 0.0
  %319 = vmatprep.subr.mxu0 0.0
  %320 = vmatpush1.xpose.msra.mxu0 0.0
  %321 = vmatprep.subr.mxu0 0.0
  %322 = vmatpush1.xpose.msra.mxu0 0.0
  %323 = vmatprep.subr.mxu0 0.0
  %324 = vmatpush1.xpose.msra.mxu0 0.0
  %325 = vmatprep.subr.mxu0 0.0
  %326 = vmatpush1.xpose.msra.mxu0 0.0
  %327 = vmatprep.subr.mxu0 0.0
  %328 = vmatpush1.xpose.msra.mxu0 0.0
  %329 = vmatprep.subr.mxu0 0.0
  %330 = vmatpush1.xpose.msra.mxu0 0.0
  %331 = vmatprep.subr.mxu0 0.0
  %332 = vmatpush1.xpose.msra.mxu0 0.0
  %333 = vmatprep.subr.mxu0 0.0
  %334 = vmatpush1.xpose.msra.mxu0 0.0
  %335 = vmatprep.subr.mxu0 0.0
  %336 = vmatpush1.xpose.msra.mxu0 0.0
  %337 = vmatprep.subr.mxu0 0.0
  %338 = vmatpush1.xpose.msra.mxu0 0.0
  %339 = vmatprep.subr.mxu0 0.0
  %340 = vmatpush1.xpose.msra.mxu0 0.0
  %341 = vmatprep.subr.mxu0 0.0
  %342 = vmatpush1.xpose.msra.mxu0 0.0
  %343 = vmatprep.subr.mxu0 0.0
  %344 = vmatpush1.xpose.msra.mxu0 0.0
  %345 = vmatprep.subr.mxu0 0.0
  %346 = vmatpush1.xpose.msra.mxu0 0.0
  %347 = vmatprep.subr.mxu0 0.0
  %348 = vmatpush1.xpose.msra.mxu0 0.0
  %349 = vmatprep.subr.mxu0 0.0
  %350 = vmatpush1.xpose.msra.mxu0 0.0
  %351 = vmatprep.subr.mxu0 0.0
  %352 = vmatpush1.xpose.msra.mxu0 0.0
  %353 = vmatprep.subr.mxu0 0.0
  %354 = vmatpush1.xpose.msra.mxu0 0.0
  %355 = vmatprep.subr.mxu0 0.0
  %356 = vmatpush1.xpose.msra.mxu0 0.0
  %357 = vmatprep.subr.mxu0 0.0
  %358 = vmatpush1.xpose.msra.mxu0 0.0
  %359 = vmatprep.subr.mxu0 0.0
  %360 = vmatpush1.xpose.msra.mxu0 0.0
  %361 = vmatprep.subr.mxu0 0.0
  %362 = vmatpush1.xpose.msra.mxu0 0.0
  %363 = vmatprep.subr.mxu0 0.0
  %364 = vmatpush1.xpose.msra.mxu0 0.0
  %365 = vmatprep.subr.mxu0 0.0
  %366 = vmatpush1.xpose.msra.mxu0 0.0
  %367 = vmatprep.subr.mxu0 0.0
  %368 = vmatpush1.xpose.msra.mxu0 0.0
  %369 = vmatprep.mubr.f32.mxu0 %v222
  %370 = vmatmul.mubr.f32.gmra.mrb[0].mxu0 %v220
  %v371 = vpop.f32.mrb[0].mxu0
  %v372 = vadd.f32 0.0, %v371
  %v373 = vpop.f32.mrb[0].mxu0
  %374 = vmatprep.mubr.f32.mxu0 %v228
  %375 = vmatmul.mubr.f32.gmra.mrb[0].mxu0 %v226
  %v376 = vpop.f32.mrb[0].mxu0
  %v377 = vadd.f32 0.0, %v376
  %v378 = vpop.f32.mrb[0].mxu0
  %379 = vdwg.mxu0
  %v380 = vadd.f32 %v297, %v372
  %v381 = vadd.f32 %v302, %v377
  %v382 = vsel %vm54, %v380, 0.0
  %vm383 = vcmask 57344
  %v384 = vsel %vm383, %v381, 0.0
  %v385 = vadd.f32 %v382, %v384
  %v386 = vrot.slane %v385, 4
  %v387 = vadd.f32 %v385, %v386
  %v388 = vrot.slane %v387, 2
  %v389 = vadd.f32 %v387, %v388
  %v390 = vrot.slane %v389, 1
  %v391 = vadd.f32 %v389, %v390
  %v392 = vrcp.pop 18.0
  %v393 = vmul.f32 %v391, %v392
  %v394 = vsub.f32 %v297, %v393
  %v395 = vsub.f32 %v302, %v393
  %v396 = vmul.f32 %v394, %v394
  %v397 = vmul.f32 %v395, %v395
  %v398 = vsel %vm54, %v396, 0.0
  %v399 = vsel %vm383, %v397, 0.0
  %v400 = vadd.f32 %v398, %v399
  %v401 = vrot.slane %v400, 4
  %v402 = vadd.f32 %v400, %v401
  %v403 = vrot.slane %v402, 2
  %v404 = vadd.f32 %v402, %v403
  %v405 = vrot.slane %v404, 1
  %v406 = vadd.f32 %v404, %v405
  %v407 = vadd.f32 %v406, 0.0
  %v408 = vsub.f32 %v372, %v393
  %v409 = vsub.f32 %v377, %v393
  %v410 = vmul.f32 %v408, %v408
  %v411 = vmul.f32 %v409, %v409
  %v412 = vsel %vm54, %v410, 0.0
  %v413 = vsel %vm383, %v411, 0.0
  %v414 = vadd.f32 %v412, %v413
  %v415 = vrot.slane %v414, 4
  %v416 = vadd.f32 %v414, %v415
  %v417 = vrot.slane %v416, 2
  %v418 = vadd.f32 %v416, %v417
  %v419 = vrot.slane %v418, 1
  %v420 = vadd.f32 %v418, %v419
  %v421 = vadd.f32 %v407, %v420
  %v422 = vmul.f32 %v421, %v392
  %v423 = vadd.f32 %v422, 1e-05
  %v424 = vrsqrt.pop %v423
  %v425 = vld [vmem:[%s3] sm:$0x1]
  %v426 = vmul.f32 %v424, %v425
  %v427 = vld [vmem:[%s4] sm:$0x1]
  %v428 = vmul.f32 %v393, %v426
  %v429 = vsub.f32 %v427, %v428
  %v430 = vld [vmem:[%s6] sm:$0xff]
  %v431 = vld [vmem:[%s6 + $0x8] sm:$0xff]
  %v432 = vld [vmem:[%s6 + $0x10] sm:$0xff]
  %v433 = vld [vmem:[%s6 + $0x18] sm:$0x7]
  %v434 = vld [vmem:[%s5] sm:$0xff]
  %v435 = vld [vmem:[%s7] sm:$0xff]
  %v436 = vld [vmem:[%s7 + $0x8] sm:$0xff]
  %v437 = vld [vmem:[%s7 + $0x10] sm:$0xff]
  %v438 = vld [vmem:[%s7 + $0x18] sm:$0x7]
  %v439 = vlaneseq
  %v440 = vshrl.u32 %v439, 7
  %v441 = vsub.s32 0, %v440
  %v442 = vrot.slane %v426, %v441
  %v443 = vmul.f32 %v297, %v442
  %v444 = vmul.f32 %v302, %v442
  %v446 = vlaneseq
  %v447 = vshrl.u32 %v446, 7
  %v448 = vsub.s32 0, %v447
  %v449 = vrot.slane %v429, %v448
  %v451 = vadd.f32 %v443, %v449
  %v452 = vadd.f32 %v444, %v449
  %vm453 = vcmask 72704
  %v455 = vsel %vm453, %v430, 0
  %v458 = vsel %vm453, %v431, 0
  %v461 = vsel %vm453, %v432, 0
  %v464 = vsel %vm453, %v433, 0
  %vm466 = vcmask 1040384
  %v468 = vsel %vm466, %v452, 0
  %470 = vmatprep.subr.mxu0 0.0
  %471 = vmatpush1.msra.mxu0 %v451
  %472 = vmatprep.subr.mxu0 0.0
  %473 = vmatpush1.msra.mxu0 %v468
  %474 = vmatprep.subr.mxu0 0.0
  %475 = vmatpush1.msra.mxu0 0.0
  %476 = vmatprep.subr.mxu0 0.0
  %477 = vmatpush1.msra.mxu0 0.0
  %478 = vmatprep.subr.mxu0 0.0
  %479 = vmatpush1.msra.mxu0 0.0
  %480 = vmatprep.subr.mxu0 0.0
  %481 = vmatpush1.msra.mxu0 0.0
  %482 = vmatprep.subr.mxu0 0.0
  %483 = vmatpush1.msra.mxu0 0.0
  %484 = vmatprep.subr.mxu0 0.0
  %485 = vmatpush1.msra.mxu0 0.0
  %486 = vmatprep.subr.mxu0 0.0
  %487 = vmatpush1.msra.mxu0 0.0
  %488 = vmatprep.subr.mxu0 0.0
  %489 = vmatpush1.msra.mxu0 0.0
  %490 = vmatprep.subr.mxu0 0.0
  %491 = vmatpush1.msra.mxu0 0.0
  %492 = vmatprep.subr.mxu0 0.0
  %493 = vmatpush1.msra.mxu0 0.0
  %494 = vmatprep.subr.mxu0 0.0
  %495 = vmatpush1.msra.mxu0 0.0
  %496 = vmatprep.subr.mxu0 0.0
  %497 = vmatpush1.msra.mxu0 0.0
  %498 = vmatprep.subr.mxu0 0.0
  %499 = vmatpush1.msra.mxu0 0.0
  %500 = vmatprep.subr.mxu0 0.0
  %501 = vmatpush1.msra.mxu0 0.0
  %502 = vmatprep.subr.mxu0 0.0
  %503 = vmatpush1.msra.mxu0 0.0
  %504 = vmatprep.subr.mxu0 0.0
  %505 = vmatpush1.msra.mxu0 0.0
  %506 = vmatprep.subr.mxu0 0.0
  %507 = vmatpush1.msra.mxu0 0.0
  %508 = vmatprep.subr.mxu0 0.0
  %509 = vmatpush1.msra.mxu0 0.0
  %510 = vmatprep.subr.mxu0 0.0
  %511 = vmatpush1.msra.mxu0 0.0
  %512 = vmatprep.subr.mxu0 0.0
  %513 = vmatpush1.msra.mxu0 0.0
  %514 = vmatprep.subr.mxu0 0.0
  %515 = vmatpush1.msra.mxu0 0.0
  %516 = vmatprep.subr.mxu0 0.0
  %517 = vmatpush1.msra.mxu0 0.0
  %518 = vmatprep.subr.mxu0 0.0
  %519 = vmatpush1.msra.mxu0 0.0
  %520 = vmatprep.subr.mxu0 0.0
  %521 = vmatpush1.msra.mxu0 0.0
  %522 = vmatprep.subr.mxu0 0.0
  %523 = vmatpush1.msra.mxu0 0.0
  %524 = vmatprep.subr.mxu0 0.0
  %525 = vmatpush1.msra.mxu0 0.0
  %526 = vmatprep.subr.mxu0 0.0
  %527 = vmatpush1.msra.mxu0 0.0
  %528 = vmatprep.subr.mxu0 0.0
  %529 = vmatpush1.msra.mxu0 0.0
  %530 = vmatprep.subr.mxu0 0.0
  %531 = vmatpush1.msra.mxu0 0.0
  %532 = vmatprep.subr.mxu0 0.0
  %533 = vmatpush1.msra.mxu0 0.0
  %534 = vmatprep.mubr.f32.mxu0 0.0
  %535 = vmatmul.mubr.f32.gmra.mrb[0].mxu0 %v455
  %v536 = vpop.f32.mrb[0].mxu0
  %v537 = vadd.f32 0.0, %v536
  %v538 = vpop.f32.mrb[0].mxu0
  %539 = vmatprep.mubr.f32.mxu0 0.0
  %540 = vmatmul.mubr.f32.gmra.mrb[0].mxu0 %v458
  %v541 = vpop.f32.mrb[0].mxu0
  %v542 = vadd.f32 0.0, %v541
  %v543 = vpop.f32.mrb[0].mxu0
  %544 = vmatprep.mubr.f32.mxu0 0.0
  %545 = vmatmul.mubr.f32.gmra.mrb[0].mxu0 %v461
  %v546 = vpop.f32.mrb[0].mxu0
  %v547 = vadd.f32 0.0, %v546
  %v548 = vpop.f32.mrb[0].mxu0
  %549 = vmatprep.mubr.f32.mxu0 0.0
  %550 = vmatmul.mubr.f32.gmra.mrb[0].mxu0 %v464
  %v551 = vpop.f32.mrb[0].mxu0
  %v552 = vadd.f32 0.0, %v551
  %v553 = vpop.f32.mrb[0].mxu0
  %554 = vdwg.mxu0
  %v556 = vsel %vm54, %v537, 0
  %v559 = vsel %vm54, %v542, 0
  %v562 = vsel %vm54, %v547, 0
  %v565 = vsel %vm54, %v552, 0
  %567 = vmatprep.subr.mxu0 0.0
  %568 = vmatpush1.msra.mxu0 %v434
  %569 = vmatprep.subr.mxu0 0.0
  %570 = vmatpush1.msra.mxu0 0.0
  %571 = vmatprep.subr.mxu0 0.0
  %572 = vmatpush1.msra.mxu0 0.0
  %573 = vmatprep.subr.mxu0 0.0
  %574 = vmatpush1.msra.mxu0 0.0
  %575 = vmatprep.subr.mxu0 0.0
  %576 = vmatpush1.msra.mxu0 0.0
  %577 = vmatprep.subr.mxu0 0.0
  %578 = vmatpush1.msra.mxu0 0.0
  %579 = vmatprep.subr.mxu0 0.0
  %580 = vmatpush1.msra.mxu0 0.0
  %581 = vmatprep.subr.mxu0 0.0
  %582 = vmatpush1.msra.mxu0 0.0
  %583 = vmatprep.subr.mxu0 0.0
  %584 = vmatpush1.msra.mxu0 0.0
  %585 = vmatprep.subr.mxu0 0.0
  %586 = vmatpush1.msra.mxu0 0.0
  %587 = vmatprep.subr.mxu0 0.0
  %588 = vmatpush1.msra.mxu0 0.0
  %589 = vmatprep.subr.mxu0 0.0
  %590 = vmatpush1.msra.mxu0 0.0
  %591 = vmatprep.subr.mxu0 0.0
  %592 = vmatpush1.msra.mxu0 0.0
  %593 = vmatprep.subr.mxu0 0.0
  %594 = vmatpush1.msra.mxu0 0.0
  %595 = vmatprep.subr.mxu0 0.0
  %596 = vmatpush1.msra.mxu0 0.0
  %597 = vmatprep.subr.mxu0 0.0
  %598 = vmatpush1.msra.mxu0 0.0
  %599 = vmatprep.subr.mxu0 0.0
  %600 = vmatpush1.msra.mxu0 0.0
  %601 = vmatprep.subr.mxu0 0.0
  %602 = vmatpush1.msra.mxu0 0.0
  %603 = vmatprep.subr.mxu0 0.0
  %604 = vmatpush1.msra.mxu0 0.0
  %605 = vmatprep.subr.mxu0 0.0
  %606 = vmatpush1.msra.mxu0 0.0
  %607 = vmatprep.subr.mxu0 0.0
  %608 = vmatpush1.msra.mxu0 0.0
  %609 = vmatprep.subr.mxu0 0.0
  %610 = vmatpush1.msra.mxu0 0.0
  %611 = vmatprep.subr.mxu0 0.0
  %612 = vmatpush1.msra.mxu0 0.0
  %613 = vmatprep.subr.mxu0 0.0
  %614 = vmatpush1.msra.mxu0 0.0
  %615 = vmatprep.subr.mxu0 0.0
  %616 = vmatpush1.msra.mxu0 0.0
  %617 = vmatprep.subr.mxu0 0.0
  %618 = vmatpush1.msra.mxu0 0.0
  %619 = vmatprep.subr.mxu0 0.0
  %620 = vmatpush1.msra.mxu0 0.0
  %621 = vmatprep.subr.mxu0 0.0
  %622 = vmatpush1.msra.mxu0 0.0
  %623 = vmatprep.subr.mxu0 0.0
  %624 = vmatpush1.msra.mxu0 0.0
  %625 = vmatprep.subr.mxu0 0.0
  %626 = vmatpush1.msra.mxu0 0.0
  %627 = vmatprep.subr.mxu0 0.0
  %628 = vmatpush1.msra.mxu0 0.0
  %629 = vmatprep.subr.mxu0 0.0
  %630 = vmatpush1.msra.mxu0 0.0
  %631 = vmatprep.mubr.f32.mxu0 0.0
  %632 = vmatmul.mubr.f32.gmra.mrb[0].mxu0 %v556
  %v633 = vpop.f32.mrb[0].mxu0
  %v634 = vadd.f32 0.0, %v633
  %v635 = vpop.f32.mrb[0].mxu0
  %636 = vmatprep.mubr.f32.mxu0 0.0
  %637 = vmatmul.mubr.f32.gmra.mrb[0].mxu0 %v559
  %v638 = vpop.f32.mrb[0].mxu0
  %v639 = vadd.f32 0.0, %v638
  %v640 = vpop.f32.mrb[0].mxu0
  %641 = vmatprep.mubr.f32.mxu0 0.0
  %642 = vmatmul.mubr.f32.gmra.mrb[0].mxu0 %v562
  %v643 = vpop.f32.mrb[0].mxu0
  %v644 = vadd.f32 0.0, %v643
  %v645 = vpop.f32.mrb[0].mxu0
  %646 = vmatprep.mubr.f32.mxu0 0.0
  %647 = vmatmul.mubr.f32.gmra.mrb[0].mxu0 %v565
  %v648 = vpop.f32.mrb[0].mxu0
  %v649 = vadd.f32 0.0, %v648
  %v650 = vpop.f32.mrb[0].mxu0
  %651 = vdwg.mxu0
  %v652 = vmul.f32 %v634, %v435
  %v653 = vmul.f32 %v639, %v436
  %v654 = vmul.f32 %v644, %v437
  %v655 = vmul.f32 %v649, %v438
  %656 = vst [vmem:[%s8] sm:$0xff] %v652
  %657 = vst [vmem:[%s8 + $0x8] sm:$0xff] %v653
  %658 = vst [vmem:[%s8 + $0x10] sm:$0xff] %v654
  %659 = vst [vmem:[%s8 + $0x18] sm:$0x7] %v655
  %v660 = vmul.f32 %v372, %v442
  %v661 = vmul.f32 %v377, %v442
  %v662 = vadd.f32 %v660, %v449
  %v663 = vadd.f32 %v661, %v449
  %v665 = vsel %vm466, %v663, 0
  %667 = vmatprep.subr.mxu0 0.0
  %668 = vmatpush1.msra.mxu0 %v662
  %669 = vmatprep.subr.mxu0 0.0
  %670 = vmatpush1.msra.mxu0 %v665
  %671 = vmatprep.subr.mxu0 0.0
  %672 = vmatpush1.msra.mxu0 0.0
  %673 = vmatprep.subr.mxu0 0.0
  %674 = vmatpush1.msra.mxu0 0.0
  %675 = vmatprep.subr.mxu0 0.0
  %676 = vmatpush1.msra.mxu0 0.0
  %677 = vmatprep.subr.mxu0 0.0
  %678 = vmatpush1.msra.mxu0 0.0
  %679 = vmatprep.subr.mxu0 0.0
  %680 = vmatpush1.msra.mxu0 0.0
  %681 = vmatprep.subr.mxu0 0.0
  %682 = vmatpush1.msra.mxu0 0.0
  %683 = vmatprep.subr.mxu0 0.0
  %684 = vmatpush1.msra.mxu0 0.0
  %685 = vmatprep.subr.mxu0 0.0
  %686 = vmatpush1.msra.mxu0 0.0
  %687 = vmatprep.subr.mxu0 0.0
  %688 = vmatpush1.msra.mxu0 0.0
  %689 = vmatprep.subr.mxu0 0.0
  %690 = vmatpush1.msra.mxu0 0.0
  %691 = vmatprep.subr.mxu0 0.0
  %692 = vmatpush1.msra.mxu0 0.0
  %693 = vmatprep.subr.mxu0 0.0
  %694 = vmatpush1.msra.mxu0 0.0
  %695 = vmatprep.subr.mxu0 0.0
  %696 = vmatpush1.msra.mxu0 0.0
  %697 = vmatprep.subr.mxu0 0.0
  %698 = vmatpush1.msra.mxu0 0.0
  %699 = vmatprep.subr.mxu0 0.0
  %700 = vmatpush1.msra.mxu0 0.0
  %701 = vmatprep.subr.mxu0 0.0
  %702 = vmatpush1.msra.mxu0 0.0
  %703 = vmatprep.subr.mxu0 0.0
  %704 = vmatpush1.msra.mxu0 0.0
  %705 = vmatprep.subr.mxu0 0.0
  %706 = vmatpush1.msra.mxu0 0.0
  %707 = vmatprep.subr.mxu0 0.0
  %708 = vmatpush1.msra.mxu0 0.0
  %709 = vmatprep.subr.mxu0 0.0
  %710 = vmatpush1.msra.mxu0 0.0
  %711 = vmatprep.subr.mxu0 0.0
  %712 = vmatpush1.msra.mxu0 0.0
  %713 = vmatprep.subr.mxu0 0.0
  %714 = vmatpush1.msra.mxu0 0.0
  %715 = vmatprep.subr.mxu0 0.0
  %716 = vmatpush1.msra.mxu0 0.0
  %717 = vmatprep.subr.mxu0 0.0
  %718 = vmatpush1.msra.mxu0 0.0
  %719 = vmatprep.subr.mxu0 0.0
  %720 = vmatpush1.msra.mxu0 0.0
  %721 = vmatprep.subr.mxu0 0.0
  %722 = vmatpush1.msra.mxu0 0.0
  %723 = vmatprep.subr.mxu0 0.0
  %724 = vmatpush1.msra.mxu0 0.0
  %725 = vmatprep.subr.mxu0 0.0
  %726 = vmatpush1.msra.mxu0 0.0
  %727 = vmatprep.subr.mxu0 0.0
  %728 = vmatpush1.msra.mxu0 0.0
  %729 = vmatprep.subr.mxu0 0.0
  %730 = vmatpush1.msra.mxu0 0.0
  %731 = vmatprep.mubr.f32.mxu0 0.0
  %732 = vmatmul.mubr.f32.gmra.mrb[0].mxu0 %v455
  %v733 = vpop.f32.mrb[0].mxu0
  %v734 = vadd.f32 0.0, %v733
  %v735 = vpop.f32.mrb[0].mxu0
  %736 = vmatprep.mubr.f32.mxu0 0.0
  %737 = vmatmul.mubr.f32.gmra.mrb[0].mxu0 %v458
  %v738 = vpop.f32.mrb[0].mxu0
  %v739 = vadd.f32 0.0, %v738
  %v740 = vpop.f32.mrb[0].mxu0
  %741 = vmatprep.mubr.f32.mxu0 0.0
  %742 = vmatmul.mubr.f32.gmra.mrb[0].mxu0 %v461
  %v743 = vpop.f32.mrb[0].mxu0
  %v744 = vadd.f32 0.0, %v743
  %v745 = vpop.f32.mrb[0].mxu0
  %746 = vmatprep.mubr.f32.mxu0 0.0
  %747 = vmatmul.mubr.f32.gmra.mrb[0].mxu0 %v464
  %v748 = vpop.f32.mrb[0].mxu0
  %v749 = vadd.f32 0.0, %v748
  %v750 = vpop.f32.mrb[0].mxu0
  %751 = vdwg.mxu0
  %v753 = vsel %vm54, %v734, 0
  %v756 = vsel %vm54, %v739, 0
  %v759 = vsel %vm54, %v744, 0
  %v762 = vsel %vm54, %v749, 0
  %764 = vmatprep.subr.mxu0 0.0
  %765 = vmatpush1.msra.mxu0 %v434
  %766 = vmatprep.subr.mxu0 0.0
  %767 = vmatpush1.msra.mxu0 0.0
  %768 = vmatprep.subr.mxu0 0.0
  %769 = vmatpush1.msra.mxu0 0.0
  %770 = vmatprep.subr.mxu0 0.0
  %771 = vmatpush1.msra.mxu0 0.0
  %772 = vmatprep.subr.mxu0 0.0
  %773 = vmatpush1.msra.mxu0 0.0
  %774 = vmatprep.subr.mxu0 0.0
  %775 = vmatpush1.msra.mxu0 0.0
  %776 = vmatprep.subr.mxu0 0.0
  %777 = vmatpush1.msra.mxu0 0.0
  %778 = vmatprep.subr.mxu0 0.0
  %779 = vmatpush1.msra.mxu0 0.0
  %780 = vmatprep.subr.mxu0 0.0
  %781 = vmatpush1.msra.mxu0 0.0
  %782 = vmatprep.subr.mxu0 0.0
  %783 = vmatpush1.msra.mxu0 0.0
  %784 = vmatprep.subr.mxu0 0.0
  %785 = vmatpush1.msra.mxu0 0.0
  %786 = vmatprep.subr.mxu0 0.0
  %787 = vmatpush1.msra.mxu0 0.0
  %788 = vmatprep.subr.mxu0 0.0
  %789 = vmatpush1.msra.mxu0 0.0
  %790 = vmatprep.subr.mxu0 0.0
  %791 = vmatpush1.msra.mxu0 0.0
  %792 = vmatprep.subr.mxu0 0.0
  %793 = vmatpush1.msra.mxu0 0.0
  %794 = vmatprep.subr.mxu0 0.0
  %795 = vmatpush1.msra.mxu0 0.0
  %796 = vmatprep.subr.mxu0 0.0
  %797 = vmatpush1.msra.mxu0 0.0
  %798 = vmatprep.subr.mxu0 0.0
  %799 = vmatpush1.msra.mxu0 0.0
  %800 = vmatprep.subr.mxu0 0.0
  %801 = vmatpush1.msra.mxu0 0.0
  %802 = vmatprep.subr.mxu0 0.0
  %803 = vmatpush1.msra.mxu0 0.0
  %804 = vmatprep.subr.mxu0 0.0
  %805 = vmatpush1.msra.mxu0 0.0
  %806 = vmatprep.subr.mxu0 0.0
  %807 = vmatpush1.msra.mxu0 0.0
  %808 = vmatprep.subr.mxu0 0.0
  %809 = vmatpush1.msra.mxu0 0.0
  %810 = vmatprep.subr.mxu0 0.0
  %811 = vmatpush1.msra.mxu0 0.0
  %812 = vmatprep.subr.mxu0 0.0
  %813 = vmatpush1.msra.mxu0 0.0
  %814 = vmatprep.subr.mxu0 0.0
  %815 = vmatpush1.msra.mxu0 0.0
  %816 = vmatprep.subr.mxu0 0.0
  %817 = vmatpush1.msra.mxu0 0.0
  %818 = vmatprep.subr.mxu0 0.0
  %819 = vmatpush1.msra.mxu0 0.0
  %820 = vmatprep.subr.mxu0 0.0
  %821 = vmatpush1.msra.mxu0 0.0
  %822 = vmatprep.subr.mxu0 0.0
  %823 = vmatpush1.msra.mxu0 0.0
  %824 = vmatprep.subr.mxu0 0.0
  %825 = vmatpush1.msra.mxu0 0.0
  %826 = vmatprep.subr.mxu0 0.0
  %827 = vmatpush1.msra.mxu0 0.0
  %828 = vmatprep.mubr.f32.mxu0 0.0
  %829 = vmatmul.mubr.f32.gmra.mrb[0].mxu0 %v753
  %v830 = vpop.f32.mrb[0].mxu0
  %v831 = vadd.f32 0.0, %v830
  %v832 = vpop.f32.mrb[0].mxu0
  %833 = vmatprep.mubr.f32.mxu0 0.0
  %834 = vmatmul.mubr.f32.gmra.mrb[0].mxu0 %v756
  %v835 = vpop.f32.mrb[0].mxu0
  %v836 = vadd.f32 0.0, %v835
  %v837 = vpop.f32.mrb[0].mxu0
  %838 = vmatprep.mubr.f32.mxu0 0.0
  %839 = vmatmul.mubr.f32.gmra.mrb[0].mxu0 %v759
  %v840 = vpop.f32.mrb[0].mxu0
  %v841 = vadd.f32 0.0, %v840
  %v842 = vpop.f32.mrb[0].mxu0
  %843 = vmatprep.mubr.f32.mxu0 0.0
  %844 = vmatmul.mubr.f32.gmra.mrb[0].mxu0 %v762
  %v845 = vpop.f32.mrb[0].mxu0
  %v846 = vadd.f32 0.0, %v845
  %v847 = vpop.f32.mrb[0].mxu0
  %848 = vdwg.mxu0
  %v849 = vmul.f32 %v831, %v435
  %v850 = vmul.f32 %v836, %v436
  %v851 = vmul.f32 %v841, %v437
  %v852 = vmul.f32 %v846, %v438
  %s853 = scalar_lea.vmem %s8, 32
  %854 = vst [vmem:[%s853] sm:$0xff] %v849
  %855 = vst [vmem:[%s853 + $0x8] sm:$0xff] %v850
  %856 = vst [vmem:[%s853 + $0x10] sm:$0xff] %v851
  %857 = vst [vmem:[%s853 + $0x18] sm:$0x7] %v852
  // Predicated region
  $region34: #{tpu_custom_call.1} parent=0 // pred_check
    _
  $region35: #{tpu_custom_call.1} parent=0 // pred_check_branch
    %859 = sbr.rel (0) target = $region37
  $region36: #{tpu_custom_call.1} parent=0 // pred_region
    _
  $region37: #{tpu_custom_call.1} parent=0 // pred_fallthru
    _
  // Predicated region
  $region38: #{tpu_custom_call.1} parent=0 // pred_check
    _
  $region39: #{tpu_custom_call.1} parent=0 // pred_check_branch
    %861 = sbr.rel (0) target = $region41
  $region40: #{tpu_custom_call.1} parent=0 // pred_region
    _
  $region41: #{tpu_custom_call.1} parent=0 // pred_fallthru
    _

</llo_original>
